<compile_context>
chip_gen: v7x
topology: tpu7x:2x2x1
jax: 0.10.0
libtpu: 0.0.40
codegen_flags: <defaults>
</compile_context>

<pallas_src>
import functools

import jax
import jax.numpy as jnp
from jax.experimental import pallas as pl
from jax.experimental.pallas import tpu as pltpu


def _pe_alpha_kernel(alpha_ref, x_ref, pe_ref, o_ref):
    # alpha_ref: SMEM (1,) f32; x_ref: (bB, tN); pe_ref: (1, tN); o_ref: (bB, tN)
    alpha = alpha_ref[0]
    x = x_ref[...].astype(jnp.float32)
    pe = pe_ref[...].astype(jnp.float32)          # broadcasts (1, tN) over (bB, tN)
    # NOTE: PyTorch would type-promote a bf16 x against the f32 pe buffer to an
    # f32 output; here the result is cast back to x.dtype (intended behavior).
    o_ref[...] = (x + alpha * pe).astype(o_ref.dtype)


def build_pe_table(max_len: int, hidden_size: int) -> jnp.ndarray:
    """Plain-JAX construction of the sinusoidal table (matches the PyTorch init)."""
    position = jnp.arange(max_len, dtype=jnp.float32)[:, None]            # (max_len, 1)
    div_term = jnp.power(
        10000.0, jnp.arange(0, hidden_size, 2, dtype=jnp.float32) / hidden_size
    )                                                                      # (ceil(H/2),)
    ang = position / div_term                                              # (max_len, ceil(H/2))
    pe = jnp.zeros((max_len, hidden_size), dtype=jnp.float32)
    pe = pe.at[:, 0::2].set(jnp.sin(ang))
    pe = pe.at[:, 1::2].set(jnp.cos(ang[:, : hidden_size // 2]))           # odd-H safe
    return pe


def _round_up(v: int, m: int) -> int:
    return ((v + m - 1) // m) * m


def _cdiv(a: int, b: int) -> int:
    return (a + b - 1) // b


def _physical_vmem_bytes() -> int:
    """Per-core physical VMEM (v5e/v6e: 128 MiB, v7x: 64 MiB). Conservative fallback."""
    try:
        return int(pltpu.get_tpu_info().vmem_capacity_bytes)
    except Exception:
        return 64 << 20


def _pick_tiles(B: int, N: int, itemsize: int, target_block_bytes: int):
    """Pick (batch tile bB, lane tile tN) for a (B, N) streaming add."""
    N_pad = _round_up(N, 128)
    # Keep each row of a strided (bB, tN) block DMA >= ~2 KiB contiguous.
    min_tN = min(N_pad, _round_up(max(128, _cdiv(2048, itemsize)), 128))

    # First try: whole batch resident in one block, lane tile sized to target.
    bB = B
    tN = (target_block_bytes // (max(1, bB) * itemsize)) // 128 * 128

    if tN < min_tN:
        # Large batch: keep lane rows long, split the batch (multiple of 8) instead.
        tN = min_tN
        rows = target_block_bytes // (tN * itemsize)
        bB = min(B, max(8, (rows // 8) * 8)) if B > 8 else B

    tN = max(128, min(tN, N_pad))

    # Only force >= 2 grid steps when the whole problem would otherwise be a
    # single step: feeds both v7x TensorCores; near-free on single-TC chips
    # (only triggers for tiny inputs) and never shrinks blocks for real work.
    if _cdiv(B, bB) * _cdiv(N, tN) == 1 and N_pad >= 256:
        tN = max(128, _round_up(_cdiv(N_pad, 2), 128))

    return bB, tN


@functools.partial(
    jax.jit,
    static_argnames=("target_block_bytes", "cast_pe_to_input_dtype", "buffer_count"),
)
def positional_encoding_with_alpha(
    x,
    pe_table,
    alpha,
    *,
    target_block_bytes=4 << 20,       # sweep knob: 4 / 8 MiB
    cast_pe_to_input_dtype=True,      # halve pe HBM bytes for bf16 x (math stays f32)
    buffer_count=None,                # sweep knob: pl.Buffered(k) on x/out (v7x)
):
    """x: (B, S, H); pe_table: (max_len, H) float32; alpha: (1,) float32."""
    B, S, H = x.shape
    max_len = pe_table.shape[0]
    if S > max_len:
        raise ValueError(f"sequence length {S} exceeds positional table max_len {max_len}")

    N = S * H
    itemsize = jnp.dtype(x.dtype).itemsize

    # Lane-dense layout: flatten (S, H) -> N.  Row-major contiguous, so these
    # reshapes are free metadata ops (no extra HBM traffic).
    x2 = x.reshape(B, N)
    pe_src = pe_table[:S]                                # like self.pe[:x.size(1)]
    if cast_pe_to_input_dtype and pe_src.dtype != x.dtype:
        pe_src = pe_src.astype(x.dtype)
    pe2 = pe_src.reshape(1, N)
    pe_itemsize = jnp.dtype(pe2.dtype).itemsize

    # Generation-aware VMEM budget: cap at 3/4 of physical VMEM and clamp the
    # target block size so the honest double-buffered budget always fits.
    vmem_cap = (_physical_vmem_bytes() * 3) // 4         # ~48 MiB v7x, ~96 MiB v5e/v6e
    headroom = 4 << 20
    # pe block bytes <= pe_ratio * x block bytes (since bB >= min(B, 8)).
    pe_ratio = pe_itemsize / (min(B, 8) * itemsize)
    divisor = 4.0 + 2.0 * pe_ratio                       # 2x double-buffered (x,out) + 2x pe
    eff_target = int(max(1 << 20, min(target_block_bytes, (vmem_cap - headroom) / divisor)))

    bB, tN = _pick_tiles(B, N, itemsize, eff_target)
    grid = (pl.cdiv(N, tN), pl.cdiv(B, bB))              # N outer, B inner (pe reuse)

    block_bytes = bB * tN * itemsize
    pe_block_bytes = tN * pe_itemsize
    need = 2 * (2 * block_bytes) + 2 * pe_block_bytes + headroom
    vmem_limit = int(min(max(need, 16 << 20), vmem_cap))

    spec_kwargs = {}
    if buffer_count is not None and buffer_count != 2:
        spec_kwargs = dict(pipeline_mode=pl.Buffered(buffer_count))

    out2 = pl.pallas_call(
        _pe_alpha_kernel,
        out_shape=jax.ShapeDtypeStruct((B, N), x.dtype),
        grid=grid,
        in_specs=[
            pl.BlockSpec(memory_space=pltpu.MemorySpace.SMEM),               # alpha scalar
            pl.BlockSpec((bB, tN), lambda n, b: (b, n), **spec_kwargs),      # x tile
            pl.BlockSpec((1, tN), lambda n, b: (0, n)),                      # pe tile (batch-bcast)
        ],
        out_specs=pl.BlockSpec((bB, tN), lambda n, b: (b, n), **spec_kwargs),
        compiler_params=pltpu.CompilerParams(
            dimension_semantics=("parallel", "parallel"),
            vmem_limit_bytes=vmem_limit,
        ),
    )(alpha, x2, pe2)

    # TODO(synk): training-mode dropout (p=0.1) is stochastic and cannot match
    # PyTorch's RNG; eval-mode dropout is the identity, which is what we apply.
    return out2.reshape(B, S, H)


if __name__ == "__main__":
    hidden_size = 32
    max_len = 5000
    B, S = 2, 8

    key = jax.random.PRNGKey(0)
    x = jax.random.normal(key, (B, S, hidden_size), dtype=jnp.float32)

    # Deterministic parameter init matching the module's __init__:
    alpha = jnp.ones((1,), dtype=jnp.float32)        # nn.Parameter(torch.ones(1))
    pe_table = build_pe_table(max_len, hidden_size)  # registered buffer 'pe'

    out = positional_encoding_with_alpha(x, pe_table, alpha)
    out = jax.block_until_ready(out)

    # Sanity check against pure-JAX reference (eval-mode forward).
    ref = x + alpha[0] * pe_table[:S][None, :, :]
    assert out.shape == x.shape and out.dtype == x.dtype
    assert jnp.allclose(out, ref, atol=1e-6, rtol=1e-6), "mismatch vs reference"

    print("KERNEL_OK")
</pallas_src>

<mosaic_0001>
module attributes {stable_mosaic.version = 11 : i64} {
  func.func @_pe_alpha_kernel(%arg0: i32, %arg1: i32, %arg2: memref<1xf32, #tpu.memory_space<smem>>, %arg3: memref<2x128xf32, #tpu.memory_space<vmem>>, %arg4: memref<1x128xf32, #tpu.memory_space<vmem>>, %arg5: memref<2x128xf32, #tpu.memory_space<vmem>>) attributes {dimension_semantics = [#tpu.dimension_semantics<parallel>, #tpu.dimension_semantics<parallel>], iteration_bounds = array<i64: 2, 1>, scalar_prefetch = 0 : i64, scratch_operands = 0 : i64, tpu.core_type = #tpu.core_type<tc>, window_params = [{transform_indices = @transform_0, window_bounds = array<i64: 1>}, {transform_indices = @transform_1, window_bounds = array<i64: 2, 128>}, {transform_indices = @transform_2, window_bounds = array<i64: 1, 128>}, {transform_indices = @transform_3, window_bounds = array<i64: 2, 128>}]} {
    %c0 = arith.constant 0 : index
    %0 = memref.load %arg2[%c0] : memref<1xf32, #tpu.memory_space<smem>>
    %c0_0 = arith.constant 0 : index
    %c0_1 = arith.constant 0 : index
    %1 = vector.load %arg3[%c0_0, %c0_1] : memref<2x128xf32, #tpu.memory_space<vmem>>, vector<2x128xf32>
    %c0_2 = arith.constant 0 : index
    %c0_3 = arith.constant 0 : index
    %2 = vector.load %arg4[%c0_2, %c0_3] : memref<1x128xf32, #tpu.memory_space<vmem>>, vector<1x128xf32>
    %3 = vector.broadcast %0 : f32 to vector<1x128xf32>
    %4 = arith.mulf %3, %2 : vector<1x128xf32>
    %5 = vector.broadcast %4 : vector<1x128xf32> to vector<2x128xf32>
    %6 = arith.addf %1, %5 : vector<2x128xf32>
    %c0_4 = arith.constant 0 : index
    %c0_5 = arith.constant 0 : index
    %7 = vector.load %arg5[%c0_4, %c0_5] : memref<2x128xf32, #tpu.memory_space<vmem>>, vector<2x128xf32>
    tpu.vector_store %arg5[%c0_4, %c0_5], %6 {strides = array<i32>} : memref<2x128xf32, #tpu.memory_space<vmem>>, vector<2x128xf32>,
    return
  }
  func.func @transform_0(%arg0: i32, %arg1: i32) -> i32 {
    %c0_i32 = arith.constant 0 : i32
    %c0_i32_0 = arith.constant 0 : i32
    return %c0_i32 : i32
  }
  func.func @transform_1(%arg0: i32, %arg1: i32) -> (i32, i32) {
    %c0_i32 = arith.constant 0 : i32
    return %arg1, %arg0 : i32, i32
  }
  func.func @transform_2(%arg0: i32, %arg1: i32) -> (i32, i32) {
    %c0_i32 = arith.constant 0 : i32
    %c0_i32_0 = arith.constant 0 : i32
    return %c0_i32, %arg0 : i32, i32
  }
  func.func @transform_3(%arg0: i32, %arg1: i32) -> (i32, i32) {
    %c0_i32 = arith.constant 0 : i32
    return %arg1, %arg0 : i32, i32
  }
}

</mosaic_0001>

<llo_original>
// kernel: positional_encoding_with_alpha.1
$region0: #{positional_encoding_with_alpha.1}
  #allocation0 [shape = 'u32[]', space=smem, size = 0x4, offset = 0x4, fixed_abs, tag = 'smem constant byte address 0x4 - core index']
  #allocation1 [shape = 'u32[144,128]{1,0:T(1,128)}', space=vmem, size = 0x12000, scoped, tag = 'internal scratch']
  #allocation2 [shape = 'f32[1]{0:T(128)S(6)}', space=smem, size = 0x200, scoped, tag = 'scoped memory for positional_encoding_with_alpha.1']
  %s0 = inlined_call_operand.<no memory space> [shape: f32[1], index: 0, kind: input, shape index: {}]
  %s1 = inlined_call_operand.vmem [shape: f32[2,256], index: 1, kind: input, shape index: {}]
  %s2 = inlined_call_operand.vmem [shape: f32[1,256], index: 2, kind: input, shape index: {}]
  %s3 = inlined_call_operand.vmem [shape: f32[2,256], index: 3, kind: output, shape index: {}]
  %s4 = sld [smem:[#allocation0]]
  $region45: #{positional_encoding_with_alpha.1} parent=0
    _
  %s6 = ssub.s32 1, %s4
  %s7 = scalar_select 0, %s6, %s4
  %8 = sst [smem:[#allocation2]] %s0
  loop: start=0, step=1, limit=4
  $region2: #{positional_encoding_with_alpha.1} parent=0 // loop_pre_header
    _
  $region3: #{positional_encoding_with_alpha.1} parent=0 // loop_header
    %s10 = sphi 0, %s14
    %p11 = scmp.ge.s32.totalorder %s10, 4
    %s17 = sphi 0, %s29
    %s18 = sphi 0, %s25
    %s19 = sphi 0, %s17
    %s20 = sphi 0, %s18
    %s21 = sphi 0, %s19
    %s22 = sphi 0, %s20
    %s30 = sphi 0, %s30
    %s32 = sphi 0, %s30
    %s33 = sphi 0, %s32
    %s47 = sphi 0, %s33
    %s55 = sphi 0, %s57
    %s58 = sphi 0, %s55
    %s59 = sphi 0, %s58
    %s75 = sphi 0, %s59
    %s81 = sphi 0, %s83
    %s84 = sphi 0, %s81
    %s85 = sphi 0, %s84
    %s101 = sphi 0, %s85
    %s109 = sphi 0, %s111
    %s112 = sphi 0, %s109
    %s113 = sphi 0, %s112
    %s129 = sphi 0, %s113
  $region4: #{positional_encoding_with_alpha.1} parent=0 // loop_header_branch
    %13 = sbr.rel (%p11) target = $region8
  $region5: #{positional_encoding_with_alpha.1} parent=0 // loop_body
    %s15 = ssub.s32 %s10, 1
    %s16 = ssub.s32 %s10, 2
    %s23 = sadd.s32 1, %s18
    %p24 = scmp.ge.s32.totalorder %s23, 1
    %s25 = scalar_select %p24, 0, %s23
    %s26 = sadd.s32 1, %s17
    %s27 = scalar_select %p24, %s26, %s17
    %p28 = scmp.ge.s32.totalorder %s27, 2
    %s29 = scalar_select %p28, 0, %s27
    %s31 = sadd.s32 %s30, 1
    %p34 = scmp.eq.s32.totalorder %s10, 1
    %p35 = scmp.ne.s32.totalorder %s30, %s32
    %p36 = scmp.eq.s32.totalorder %s10, 0
    %p37 = por %p35, %p36
    %p38 = scmp.ne.s32.totalorder %s30, %s32
    %p39 = scmp.eq.s32.totalorder %s15, 1
    %p40 = por %p38, %p39
    %p41 = scmp.ne.s32.totalorder %s32, %s33
    %p42 = scmp.eq.s32.totalorder %s15, 0
    %p43 = por %p41, %p42
    %p44 = scmp.ne.s32.totalorder %s32, %s33
    %p45 = scmp.eq.s32.totalorder %s16, 1
    %p46 = por %p44, %p45
    %p48 = scmp.ne.s32.totalorder %s33, %s47
    %p49 = scmp.eq.s32.totalorder %s16, 0
    %p50 = por %p48, %p49
    %s51 = ssub.s32 %s18, %s25
    %s52 = ssub.s32 %s17, %s29
    %s53 = sor.u32 %s51, %s52
    %p54 = scmp.eq.s32.totalorder %s53, 0
    %s56 = sadd.s32 %s55, 1
    %s57 = scalar_select %p54, %s55, %s56
    %p60 = pneg %p54
    %p61 = scmp.eq.s32.totalorder %s10, 1
    %p62 = por %p60, %p61
    %p63 = scmp.ne.s32.totalorder %s55, %s58
    %p64 = scmp.eq.s32.totalorder %s10, 0
    %p65 = por %p63, %p64
    %p66 = scmp.ne.s32.totalorder %s55, %s58
    %p67 = scmp.eq.s32.totalorder %s15, 1
    %p68 = por %p66, %p67
    %p69 = scmp.ne.s32.totalorder %s58, %s59
    %p70 = scmp.eq.s32.totalorder %s15, 0
    %p71 = por %p69, %p70
    %p72 = scmp.ne.s32.totalorder %s58, %s59
    %p73 = scmp.eq.s32.totalorder %s16, 1
    %p74 = por %p72, %p73
    %p76 = scmp.ne.s32.totalorder %s59, %s75
    %p77 = scmp.eq.s32.totalorder %s16, 0
    %p78 = por %p76, %p77
    %s79 = ssub.s32 %s17, %s29
    %p80 = scmp.eq.s32.totalorder %s79, 0
    %s82 = sadd.s32 %s81, 1
    %s83 = scalar_select %p80, %s81, %s82
    %p86 = pneg %p80
    %p87 = scmp.eq.s32.totalorder %s10, 1
    %p88 = por %p86, %p87
    %p89 = scmp.ne.s32.totalorder %s81, %s84
    %p90 = scmp.eq.s32.totalorder %s10, 0
    %p91 = por %p89, %p90
    %p92 = scmp.ne.s32.totalorder %s81, %s84
    %p93 = scmp.eq.s32.totalorder %s15, 1
    %p94 = por %p92, %p93
    %p95 = scmp.ne.s32.totalorder %s84, %s85
    %p96 = scmp.eq.s32.totalorder %s15, 0
    %p97 = por %p95, %p96
    %p98 = scmp.ne.s32.totalorder %s84, %s85
    %p99 = scmp.eq.s32.totalorder %s16, 1
    %p100 = por %p98, %p99
    %p102 = scmp.ne.s32.totalorder %s85, %s101
    %p103 = scmp.eq.s32.totalorder %s16, 0
    %p104 = por %p102, %p103
    %s105 = ssub.s32 %s18, %s25
    %s106 = ssub.s32 %s17, %s29
    %s107 = sor.u32 %s105, %s106
    %p108 = scmp.eq.s32.totalorder %s107, 0
    %s110 = sadd.s32 %s109, 1
    %s111 = scalar_select %p108, %s109, %s110
    %p114 = pneg %p108
    %p115 = scmp.eq.s32.totalorder %s10, 1
    %p116 = por %p114, %p115
    %p117 = scmp.ne.s32.totalorder %s109, %s112
    %p118 = scmp.eq.s32.totalorder %s10, 0
    %p119 = por %p117, %p118
    %p120 = scmp.ne.s32.totalorder %s109, %s112
    %p121 = scmp.eq.s32.totalorder %s15, 1
    %p122 = por %p120, %p121
    %p123 = scmp.ne.s32.totalorder %s112, %s113
    %p124 = scmp.eq.s32.totalorder %s15, 0
    %p125 = por %p123, %p124
    %p126 = scmp.ne.s32.totalorder %s112, %s113
    %p127 = scmp.eq.s32.totalorder %s16, 1
    %p128 = por %p126, %p127
    %p130 = scmp.ne.s32.totalorder %s113, %s129
    %p131 = scmp.eq.s32.totalorder %s16, 0
    %p132 = por %p130, %p131
    %p133 = scmp.le.s32.totalorder 1, %s10
    %p134 = scmp.lt.s32.totalorder %s10, 3
    %p135 = pnand %p133, %p134
    %p136 = pneg %p135
    // Predicated region
    $region9: #{positional_encoding_with_alpha.1} parent=5 // pred_check
      _
    $region10: #{positional_encoding_with_alpha.1} parent=5 // pred_check_branch
      %138 = sbr.rel (%p135) target = $region12
    $region11: #{positional_encoding_with_alpha.1} parent=5 // pred_region
      %s139 = ssub.s32 %s10, 1
      // Predicated region
      $region13: #{positional_encoding_with_alpha.1} parent=11 // pred_check
        %p140 = pneg %p43
      $region14: #{positional_encoding_with_alpha.1} parent=11 // pred_check_branch
        %142 = sbr.rel (%p140) target = $region16
      $region15: #{positional_encoding_with_alpha.1} parent=11 // pred_region
        _
      $region16: #{positional_encoding_with_alpha.1} parent=11 // pred_fallthru
        _
    $region12: #{positional_encoding_with_alpha.1} parent=5 // pred_fallthru
      _
    %p143 = scmp.lt.s32.totalorder %s10, 2
    // Predicated region
    $region17: #{positional_encoding_with_alpha.1} parent=5 // pred_check
      %p144 = pneg %p143
    $region18: #{positional_encoding_with_alpha.1} parent=5 // pred_check_branch
      %146 = sbr.rel (%p144) target = $region20
    $region19: #{positional_encoding_with_alpha.1} parent=5 // pred_region
      // Predicated region
      $region21: #{positional_encoding_with_alpha.1} parent=19 // pred_check
        %p147 = pneg %p65
      $region22: #{positional_encoding_with_alpha.1} parent=19 // pred_check_branch
        %149 = sbr.rel (%p147) target = $region24
      $region23: #{positional_encoding_with_alpha.1} parent=19 // pred_region
        %p150 = scmp.lt.s32.totalorder %s18, 0
        %s151 = scalar_select %p150, %s18, 0
        %p152 = scmp.lt.s32.totalorder %s17, 1
        %s153 = scalar_select %p152, %s17, 1
        %s154 = smul.addr %s151, 2
        %s155 = sadd.s32 %s153, %s154
        %s156 = smul.addr %s155, 2
        %s157 = scalar_lea.vmem %s1, %s156
      $region24: #{positional_encoding_with_alpha.1} parent=19 // pred_fallthru
        _
      // Predicated region
      $region25: #{positional_encoding_with_alpha.1} parent=19 // pred_check
        %p158 = pneg %p91
      $region26: #{positional_encoding_with_alpha.1} parent=19 // pred_check_branch
        %160 = sbr.rel (%p158) target = $region28
      $region27: #{positional_encoding_with_alpha.1} parent=19 // pred_region
        %p161 = scmp.lt.s32.totalorder %s17, 1
        %s162 = scalar_select %p161, %s17, 1
        %s163 = scalar_lea.vmem %s2, %s162
      $region28: #{positional_encoding_with_alpha.1} parent=19 // pred_fallthru
        _
    $region20: #{positional_encoding_with_alpha.1} parent=5 // pred_fallthru
      _
    %p164 = scmp.le.s32.totalorder 1, %s10
    %p165 = scmp.lt.s32.totalorder %s10, 3
    %p166 = pnand %p164, %p165
    %p167 = pneg %p166
    // Predicated region
    $region29: #{positional_encoding_with_alpha.1} parent=5 // pred_check
      _
    $region30: #{positional_encoding_with_alpha.1} parent=5 // pred_check_branch
      %169 = sbr.rel (%p166) target = $region32
    $region31: #{positional_encoding_with_alpha.1} parent=5 // pred_region
      %s170 = ssub.s32 %s10, 1
      %p171 = pneg %p43
      %p172 = pneg %p40
      %p173 = scmp.lt.s32.totalorder %s20, 0
      %s174 = scalar_select %p173, %s20, 0
      %p175 = scmp.lt.s32.totalorder %s19, 1
      %s176 = scalar_select %p175, %s19, 1
      %s177 = smul.addr %s174, 2
      %s178 = sadd.s32 %s176, %s177
      %s179 = smul.addr %s178, 2
      %s180 = scalar_lea.vmem %s1, %s179
      %p181 = pneg %p71
      %p182 = pneg %p68
      %p183 = scmp.lt.s32.totalorder %s19, 1
      %s184 = scalar_select %p183, %s19, 1
      %s185 = scalar_lea.vmem %s2, %s184
      %p186 = pneg %p97
      %p187 = pneg %p94
      %p188 = pneg %p125
      %p189 = pneg %p122
      %p190 = scmp.lt.s32.totalorder %s20, 0
      %s191 = scalar_select %p190, %s20, 0
      %p192 = scmp.lt.s32.totalorder %s19, 1
      %s193 = scalar_select %p192, %s19, 1
      %s194 = smul.addr %s191, 2
      %s195 = sadd.s32 %s193, %s194
      %s196 = smul.addr %s195, 2
      %s197 = scalar_lea.vmem %s3, %s196
      %p198 = scmp.lt.s32.totalorder %s20, 0
      %s199 = scalar_select %p198, %s20, 0
      %p200 = scmp.lt.s32.totalorder %s19, 1
      %s201 = scalar_select %p200, %s19, 1
      %s202 = smul.addr %s199, 2
      %s203 = sadd.s32 %s201, %s202
      %s204 = smul.addr %s203, 2
      %s205 = scalar_lea.vmem %s1, %s204
      %p206 = scmp.lt.s32.totalorder %s19, 1
      %s207 = scalar_select %p206, %s19, 1
      %s208 = scalar_lea.vmem %s2, %s207
      %p209 = scmp.lt.s32.totalorder %s20, 0
      %s210 = scalar_select %p209, %s20, 0
      %p211 = scmp.lt.s32.totalorder %s19, 1
      %s212 = scalar_select %p211, %s19, 1
      %s213 = smul.addr %s210, 2
      %s214 = sadd.s32 %s212, %s213
      %s215 = smul.addr %s214, 2
      %s216 = scalar_lea.vmem %s3, %s215
      %s217 = sld [smem:[#allocation2]]
      %v218 = vld [vmem:[%s205] sm:$0x3]
      %v219 = vld [vmem:[%s208] sm:$0x1]
      %v220 = vstv %s217
      %v221 = vmul.f32 %v220, %v219
      %v223 = vlaneseq
      %v224 = vshrl.u32 %v223, 7
      %v225 = vsub.s32 0, %v224
      %v226 = vrot.slane %v221, %v225
      %v228 = vadd.f32 %v218, %v226
      %229 = vst [vmem:[%s216] sm:$0x3] %v228
      %p230 = scmp.lt.s32.totalorder %s20, 0
      %s231 = scalar_select %p230, %s20, 0
      %p232 = scmp.lt.s32.totalorder %s19, 1
      %s233 = scalar_select %p232, %s19, 1
      %s234 = smul.addr %s231, 2
      %s235 = sadd.s32 %s233, %s234
      %s236 = smul.addr %s235, 2
      %s237 = scalar_lea.vmem %s3, %s236
      // Predicated region
      $region33: #{positional_encoding_with_alpha.1} parent=31 // pred_check
        %p238 = pneg %p122
      $region34: #{positional_encoding_with_alpha.1} parent=31 // pred_check_branch
        %240 = sbr.rel (%p238) target = $region36
      $region35: #{positional_encoding_with_alpha.1} parent=31 // pred_region
        _
      $region36: #{positional_encoding_with_alpha.1} parent=31 // pred_fallthru
        _
    $region32: #{positional_encoding_with_alpha.1} parent=5 // pred_fallthru
      _
    %p241 = scmp.le.s32.totalorder 2, %s10
    // Predicated region
    $region37: #{positional_encoding_with_alpha.1} parent=5 // pred_check
      %p242 = pneg %p241
    $region38: #{positional_encoding_with_alpha.1} parent=5 // pred_check_branch
      %244 = sbr.rel (%p242) target = $region40
    $region39: #{positional_encoding_with_alpha.1} parent=5 // pred_region
      %s245 = ssub.s32 %s10, 2
      // Predicated region
      $region41: #{positional_encoding_with_alpha.1} parent=39 // pred_check
        %p246 = pneg %p128
      $region42: #{positional_encoding_with_alpha.1} parent=39 // pred_check_branch
        %248 = sbr.rel (%p246) target = $region44
      $region43: #{positional_encoding_with_alpha.1} parent=39 // pred_region
        %p249 = scmp.lt.s32.totalorder %s22, 0
        %s250 = scalar_select %p249, %s22, 0
        %p251 = scmp.lt.s32.totalorder %s21, 1
        %s252 = scalar_select %p251, %s21, 1
        %s253 = smul.addr %s250, 2
        %s254 = sadd.s32 %s252, %s253
        %s255 = smul.addr %s254, 2
        %s256 = scalar_lea.vmem %s3, %s255
      $region44: #{positional_encoding_with_alpha.1} parent=39 // pred_fallthru
        _
    $region40: #{positional_encoding_with_alpha.1} parent=5 // pred_fallthru
      _
  $region6: #{positional_encoding_with_alpha.1} parent=0 // loop_footer
    %s14 = sadd.s32 1, %s10
  $region7: #{positional_encoding_with_alpha.1} parent=0 // loop_footer_branch
    %9 = sbr.rel target = $region3
  $region8: #{positional_encoding_with_alpha.1} parent=0 // loop_exit
    _

</llo_original>
